<compile_context>
chip_gen: v7x
topology: tpu7x:2x2x1
jax: 0.10.0
libtpu: 0.0.40
codegen_flags: <defaults>
</compile_context>

<pallas_src>
import math

import jax
import jax.numpy as jnp
from jax import lax
from jax.experimental import pallas as pl
from jax.experimental.pallas import tpu as pltpu

_LANE = 128
_SUBLANE = 8
_MAX_ACC_WIDTH = 2048            # fold the accumulator's lane axis above this width
_TARGET_CHUNK_BYTES = 256 * 1024  # ~f32 bytes per streamed chunk inside the kernel


def _cdiv(a, b):
    return -(-a // b)


def _round_up(x, m):
    return _cdiv(x, m) * m


def _hw_config():
    """Generation-dependent knobs: cores for the parallel axis, tile bytes, VMEM cap."""
    vmem_bytes = 64 << 20
    try:
        vmem_bytes = int(pltpu.get_tpu_info().vmem_capacity_bytes)
    except Exception:
        pass
    kind = ""
    try:
        kind = jax.devices()[0].device_kind.lower()
    except Exception:
        pass
    single_tc = any(t in kind for t in ("v5 lite", "v5e", "v6 lite", "v6e"))
    num_cores = 1 if single_tc else 2          # v7x / v4 / v5p: 2 TensorCores
    if vmem_bytes >= (100 << 20):              # 128-MiB-VMEM parts (v5e / v6e)
        target_tile_bytes = 12 << 20
        vmem_cap = 96 << 20
    else:                                      # 64-MiB-VMEM parts (v7x)
        target_tile_bytes = 8 << 20
        vmem_cap = 52 << 20
    return num_cores, target_tile_bytes, vmem_cap


def _plan_tiles(m_rows, n_cols, itemsize, num_cores, target_tile_bytes):
    """Pick (tile_m, chunk_h, tiles_per_core, num_cores).

    Invariants (so no wrapper-side padding is needed):
      * tile_m is a multiple of chunk_h; chunk_h is a multiple of the dtype's
        sublane packing; tile_m <= m_rows (a block never exceeds the array).
      * every tile starts in-bounds; only the last one may overhang (its tail
        rows are masked in-kernel).
    """
    sub = _SUBLANE * max(1, 4 // itemsize)     # 8 f32, 16 bf16, 32 int8/fp8
    assert m_rows >= sub
    row_in_bytes = n_cols * itemsize
    row_f32_bytes = n_cols * 4

    # Chunk height: bounds in-kernel f32 temporaries to ~_TARGET_CHUNK_BYTES.
    ch = (_TARGET_CHUNK_BYTES // row_f32_bytes) // sub * sub
    ch = max(sub, min(ch, 512, (m_rows // sub) * sub))
    # Tile height: amortizes the ~0.35us/grid-step overhead; multiple of ch.
    tm = (target_tile_bytes // row_in_bytes) // ch * ch
    tm = max(ch, min(tm, (m_rows // ch) * ch))

    needed = _cdiv(m_rows, tm)
    if needed < num_cores:
        num_cores = 1
    for cores in (num_cores, 1):
        tiles_per_core = _cdiv(needed, cores)
        total = cores * tiles_per_core
        tile_m = _round_up(_cdiv(m_rows, total), ch)
        if total == 1 or (total - 1) * tile_m < m_rows:
            return tile_m, ch, tiles_per_core, cores
    raise AssertionError("unreachable tile plan")


def _plan_acc_width(n_cols):
    """Width of the resident accumulator; fold lanes for very wide rows."""
    if n_cols > _MAX_ACC_WIDTH and n_cols % _LANE == 0:
        acc_w = math.gcd(n_cols, _MAX_ACC_WIDTH)   # multiple of 128, divides n_cols
    else:
        acc_w = n_cols
        # TODO(synk): for very wide rows not divisible by 128, also tile the lane axis.
    return acc_w, n_cols // acc_w


def _make_vae_loss_kernel(m_rows, n_cols, tile_m, chunk_h, tiles_per_core,
                          acc_w, n_fold, needs_mask):
    n_chunks = tile_m // chunk_h
    groups = chunk_h // _SUBLANE

    def kernel(recons_ref, input_ref, mu_ref, logvar_ref, acc_ref, kld_ref):
        core = pl.program_id(0)
        i = pl.program_id(1)

        @pl.when(i == 0)
        def _init():
            # Zero the resident per-core accumulator block.
            acc_ref[...] = jnp.zeros_like(acc_ref)
            # KLD partial: sum over all latent elements; mu/log_var are tiny
            # resident blocks; computed once per core (epilogue reads [0, 0]).
            mu = mu_ref[...].astype(jnp.float32)
            lv = logvar_ref[...].astype(jnp.float32)
            ksum = jnp.sum(1.0 + lv - mu * mu - jnp.exp(lv))
            kld_ref[...] = jnp.broadcast_to(ksum, kld_ref.shape)

        # Absolute row index of this tile's first row (for edge-tile masking).
        tile_row0 = (core * tiles_per_core + i) * tile_m

        def chunk_body(c, carry):
            off = pl.multiple_of(c * chunk_h, chunk_h)
            r = recons_ref[pl.ds(off, chunk_h), :].astype(jnp.float32)
            x = input_ref[pl.ds(off, chunk_h), :].astype(jnp.float32)
            d = r - x
            sq = d * d
            if needs_mask:
                # Edge tile: rows at/after m_rows hold unspecified data; zero
                # them (jnp.where also squashes any NaN/Inf garbage).
                rows = tile_row0 + off + lax.broadcasted_iota(
                    jnp.int32, (chunk_h, 1), 0)
                sq = jnp.where(rows < m_rows, sq, 0.0)
            # Fold sublane groups (chunk_h -> 8 rows): pure VPU adds.
            part = sq[0:_SUBLANE, :]
            for g in range(1, groups):
                part = part + sq[g * _SUBLANE:(g + 1) * _SUBLANE, :]
            # Fold lane groups (n_cols -> acc_w): 128-aligned vreg adds.
            folded = part[:, 0:acc_w]
            for j in range(1, n_fold):
                folded = folded + part[:, j * acc_w:(j + 1) * acc_w]
            acc_ref[...] += folded
            return carry

        unroll = n_chunks if n_chunks <= 8 else 4
        lax.fori_loop(0, n_chunks, chunk_body, 0, unroll=unroll)

    return kernel


def vae_loss(recons, inputs, mu, log_var, kld_weight=0.01):
    """Pallas implementation of VAELoss.forward.

    recons, inputs: (B, C, H, W) (NCHW like PyTorch; any >=2-D shape works)
    mu, log_var:    (B, D)
    Returns (loss, {'recon_loss': ..., 'KLD_loss': ...}) as float32 scalars.
    """
    assert recons.shape == inputs.shape
    assert mu.ndim == 2 and log_var.shape == mu.shape
    n_true_elems = recons.size
    latent_batch = mu.shape[0]
    itemsize = recons.dtype.itemsize

    # Lane-dense 2-D view: collapse trailing spatial dims onto the lane axis.
    if recons.ndim >= 3:
        n_cols = recons.shape[-2] * recons.shape[-1]
    else:
        n_cols = recons.shape[-1]
    m_rows = n_true_elems // n_cols
    recons2d = recons.reshape(m_rows, n_cols)
    inputs2d = inputs.reshape(m_rows, n_cols)

    num_cores, target_tile_bytes, vmem_cap = _hw_config()

    sub = _SUBLANE * max(1, 4 // itemsize)
    m_rows_view = m_rows
    if m_rows < sub:
        # TODO(synk): degenerate tiny-row case (B*C < sublane packing) pads a copy.
        recons2d = jnp.pad(recons2d, ((0, sub - m_rows), (0, 0)))
        inputs2d = jnp.pad(inputs2d, ((0, sub - m_rows), (0, 0)))
        m_rows_view = sub

    tile_m, chunk_h, tiles_per_core, num_cores = _plan_tiles(
        m_rows_view, n_cols, itemsize, num_cores, target_tile_bytes)
    acc_w, n_fold = _plan_acc_width(n_cols)
    total_tiles = num_cores * tiles_per_core
    needs_mask = (total_tiles * tile_m) != m_rows   # overhang / pad rows -> mask

    kernel = _make_vae_loss_kernel(m_rows, n_cols, tile_m, chunk_h,
                                   tiles_per_core, acc_w, n_fold, needs_mask)

    row_block = lambda c, i: (c * tiles_per_core + i, 0)

    lane_pad = _round_up(n_cols, _LANE)
    vmem_need = (2 * 2 * tile_m * lane_pad * itemsize        # 2 inputs x 2 buffers
                 + 4 * chunk_h * lane_pad * 4                # in-kernel f32 chunk temps
                 + 2 * _SUBLANE * _round_up(acc_w, _LANE) * 4
                 + 2 * _SUBLANE * _LANE * 4
                 + 4 * _round_up(mu.shape[0], _SUBLANE) * _round_up(mu.shape[1], _LANE) * 4
                 + (2 << 20))
    vmem_limit = int(min(vmem_cap, max(32 << 20, vmem_need)))

    cost = pl.CostEstimate(
        flops=int(3 * n_true_elems + 4 * mu.size),
        transcendentals=int(mu.size),
        bytes_accessed=int(2 * n_true_elems * itemsize
                           + 2 * mu.size * mu.dtype.itemsize
                           + num_cores * _SUBLANE * (acc_w + _LANE) * 4),
    )

    acc_out, kld_out = pl.pallas_call(
        kernel,
        out_shape=(
            jax.ShapeDtypeStruct((num_cores * _SUBLANE, acc_w), jnp.float32),
            jax.ShapeDtypeStruct((num_cores * _SUBLANE, _LANE), jnp.float32),
        ),
        grid_spec=pltpu.PrefetchScalarGridSpec(
            num_scalar_prefetch=0,
            grid=(num_cores, tiles_per_core),
            in_specs=[
                pl.BlockSpec((tile_m, n_cols), row_block),            # recons tile
                pl.BlockSpec((tile_m, n_cols), row_block),            # input tile
                pl.BlockSpec(mu.shape, lambda c, i: (0, 0)),           # mu (resident)
                pl.BlockSpec(log_var.shape, lambda c, i: (0, 0)),      # log_var (resident)
            ],
            out_specs=(
                pl.BlockSpec((_SUBLANE, acc_w), lambda c, i: (c, 0)),  # per-core acc
                pl.BlockSpec((_SUBLANE, _LANE), lambda c, i: (c, 0)),  # per-core kld
            ),
        ),
        compiler_params=pltpu.CompilerParams(
            dimension_semantics=("parallel", "arbitrary"),
            vmem_limit_bytes=vmem_limit,
        ),
        cost_estimate=cost,
    )(recons2d, inputs2d, mu, log_var)

    # Tiny scalar epilogue in plain JAX (kld_weight applied here -> no recompiles).
    recon_loss = jnp.sum(acc_out) / jnp.float32(n_true_elems)
    kld_loss = -0.5 * kld_out[0, 0] / jnp.float32(latent_batch)
    weighted_kld = jnp.asarray(kld_weight, jnp.float32) * kld_loss
    loss = recon_loss + weighted_kld
    return loss, {"recon_loss": recon_loss, "KLD_loss": weighted_kld}


def _reference(recons, inputs, mu, log_var, kld_weight=0.01):
    recon = jnp.mean((recons - inputs) ** 2)
    kld = jnp.mean(-0.5 * jnp.sum(1 + log_var - mu**2 - jnp.exp(log_var), axis=1), axis=0)
    return recon + kld_weight * kld, recon, kld_weight * kld


if __name__ == "__main__":
    key = jax.random.PRNGKey(0)
    k1, k2, k3, k4, k5, k6, k7, k8 = jax.random.split(key, 8)

    # Primary case (aligned): B=2, C=4, H=W=16, latent D=32.
    B, C, H, W, D = 2, 4, 16, 16, 32
    recons = jax.random.normal(k1, (B, C, H, W), dtype=jnp.float32)
    inputs = jax.random.normal(k2, (B, C, H, W), dtype=jnp.float32)
    mu = jax.random.normal(k3, (B, D), dtype=jnp.float32) * 0.5
    log_var = jax.random.normal(k4, (B, D), dtype=jnp.float32) * 0.1

    loss, loss_vis = vae_loss(recons, inputs, mu, log_var, kld_weight=0.01)
    jax.block_until_ready(loss)
    jax.block_until_ready(loss_vis["recon_loss"])
    jax.block_until_ready(loss_vis["KLD_loss"])

    ref_loss, ref_recon, ref_kld = _reference(recons, inputs, mu, log_var, 0.01)
    assert jnp.allclose(loss, ref_loss, rtol=1e-5, atol=1e-6)
    assert jnp.allclose(loss_vis["recon_loss"], ref_recon, rtol=1e-5, atol=1e-6)
    assert jnp.allclose(loss_vis["KLD_loss"], ref_kld, rtol=1e-5, atol=1e-6)

    # Unaligned case: exercises the in-kernel edge-tile row masking (no jnp.pad).
    B2, C2, H2, W2, D2 = 3, 5, 20, 20, 16
    recons2 = jax.random.normal(k5, (B2, C2, H2, W2), dtype=jnp.float32)
    inputs2 = jax.random.normal(k6, (B2, C2, H2, W2), dtype=jnp.float32)
    mu2 = jax.random.normal(k7, (B2, D2), dtype=jnp.float32) * 0.5
    log_var2 = jax.random.normal(k8, (B2, D2), dtype=jnp.float32) * 0.1

    loss2, vis2 = vae_loss(recons2, inputs2, mu2, log_var2, kld_weight=0.05)
    jax.block_until_ready(loss2)
    ref_loss2, ref_recon2, ref_kld2 = _reference(recons2, inputs2, mu2, log_var2, 0.05)
    assert jnp.allclose(loss2, ref_loss2, rtol=1e-5, atol=1e-6)
    assert jnp.allclose(vis2["recon_loss"], ref_recon2, rtol=1e-5, atol=1e-6)
    assert jnp.allclose(vis2["KLD_loss"], ref_kld2, rtol=1e-5, atol=1e-6)

    print("KERNEL_OK")
</pallas_src>

<mosaic_0001>
module attributes {stable_mosaic.version = 11 : i64} {
  func.func @kernel(%arg0: i32, %arg1: i32, %arg2: memref<8x256xf32, #tpu.memory_space<vmem>>, %arg3: memref<8x256xf32, #tpu.memory_space<vmem>>, %arg4: memref<2x32xf32, #tpu.memory_space<vmem>>, %arg5: memref<2x32xf32, #tpu.memory_space<vmem>>, %arg6: memref<8x256xf32, #tpu.memory_space<vmem>>, %arg7: memref<8x128xf32, #tpu.memory_space<vmem>>) attributes {dimension_semantics = [#tpu.dimension_semantics<parallel>, #tpu.dimension_semantics<arbitrary>], iteration_bounds = array<i64: 1, 1>, scalar_prefetch = 0 : i64, scratch_operands = 0 : i64, tpu.core_type = #tpu.core_type<tc>, window_params = [{transform_indices = @transform_0, window_bounds = array<i64: 8, 256>}, {transform_indices = @transform_1, window_bounds = array<i64: 8, 256>}, {pipeline_mode = #tpu.pipeline_mode<synchronous>, transform_indices = @transform_2, window_bounds = array<i64: 2, 32>}, {pipeline_mode = #tpu.pipeline_mode<synchronous>, transform_indices = @transform_3, window_bounds = array<i64: 2, 32>}, {transform_indices = @transform_4, window_bounds = array<i64: 8, 256>}, {transform_indices = @transform_5, window_bounds = array<i64: 8, 128>}]} {
    %c0_i32 = arith.constant 0 : i32
    %0 = arith.cmpi eq, %arg1, %c0_i32 : i32
    %1 = arith.extui %0 : i1 to i32
    %c0_i32_0 = arith.constant 0 : i32
    %2 = arith.cmpi ne, %1, %c0_i32_0 : i32
    scf.if %2 {
      %cst = arith.constant 0.000000e+00 : f32
      %14 = vector.broadcast %cst : f32 to vector<8x256xf32>
      %c0_7 = arith.constant 0 : index
      %c0_8 = arith.constant 0 : index
      %15 = vector.load %arg6[%c0_7, %c0_8] : memref<8x256xf32, #tpu.memory_space<vmem>>, vector<8x256xf32>
      tpu.vector_store %arg6[%c0_7, %c0_8], %14 {strides = array<i32>} : memref<8x256xf32, #tpu.memory_space<vmem>>, vector<8x256xf32>,
      %c0_9 = arith.constant 0 : index
      %c0_10 = arith.constant 0 : index
      %16 = vector.load %arg4[%c0_9, %c0_10] : memref<2x32xf32, #tpu.memory_space<vmem>>, vector<2x32xf32>
      %c0_11 = arith.constant 0 : index
      %c0_12 = arith.constant 0 : index
      %17 = vector.load %arg5[%c0_11, %c0_12] : memref<2x32xf32, #tpu.memory_space<vmem>>, vector<2x32xf32>
      %cst_13 = arith.constant 1.000000e+00 : f32
      %18 = vector.broadcast %cst_13 : f32 to vector<2x32xf32>
      %19 = arith.addf %18, %17 : vector<2x32xf32>
      %20 = arith.mulf %16, %16 : vector<2x32xf32>
      %21 = arith.subf %19, %20 : vector<2x32xf32>
      %22 = math.exp %17 : vector<2x32xf32>
      %23 = arith.subf %21, %22 : vector<2x32xf32>
      %24 = vector.shape_cast %23 : vector<2x32xf32> to vector<1x2x32xf32>
      %cst_14 = arith.constant dense<0.000000e+00> : vector<1xf32>
      %25 = vector.multi_reduction <add>, %24, %cst_14 [1, 2] : vector<1x2x32xf32> to vector<1xf32>
      %26 = vector.shape_cast %25 : vector<1xf32> to vector<1x1x1xf32>
      %27 = vector.extract %26[0, 0, 0] : f32 from vector<1x1x1xf32>
      %28 = vector.broadcast %27 : f32 to vector<8x128xf32>
      %c0_15 = arith.constant 0 : index
      %c0_16 = arith.constant 0 : index
      %29 = vector.load %arg7[%c0_15, %c0_16] : memref<8x128xf32, #tpu.memory_space<vmem>>, vector<8x128xf32>
      tpu.vector_store %arg7[%c0_15, %c0_16], %28 {strides = array<i32>} : memref<8x128xf32, #tpu.memory_space<vmem>>, vector<8x128xf32>,
    } else {
    }
    %c0_i32_1 = arith.constant 0 : i32
    %c8_i32 = arith.constant 8 : i32
    %3 = arith.muli %c0_i32_1, %c8_i32 : i32
    %4 = tpu.assume_multiple %3, 8 : i32
    %5 = arith.index_cast %4 : i32 to index
    %c0 = arith.constant 0 : index
    %6 = vector.load %arg2[%5, %c0] : memref<8x256xf32, #tpu.memory_space<vmem>>, vector<8x256xf32>
    %7 = arith.index_cast %4 : i32 to index
    %c0_2 = arith.constant 0 : index
    %8 = vector.load %arg3[%7, %c0_2] : memref<8x256xf32, #tpu.memory_space<vmem>>, vector<8x256xf32>
    %9 = arith.subf %6, %8 : vector<8x256xf32>
    %10 = arith.mulf %9, %9 : vector<8x256xf32>
    %c0_3 = arith.constant 0 : index
    %c0_4 = arith.constant 0 : index
    %11 = vector.load %arg6[%c0_3, %c0_4] : memref<8x256xf32, #tpu.memory_space<vmem>>, vector<8x256xf32>
    %12 = arith.addf %11, %10 : vector<8x256xf32>
    %c0_5 = arith.constant 0 : index
    %c0_6 = arith.constant 0 : index
    %13 = vector.load %arg6[%c0_5, %c0_6] : memref<8x256xf32, #tpu.memory_space<vmem>>, vector<8x256xf32>
    tpu.vector_store %arg6[%c0_5, %c0_6], %12 {strides = array<i32>} : memref<8x256xf32, #tpu.memory_space<vmem>>, vector<8x256xf32>,
    %c1_i32 = arith.constant 1 : i32
    return
  }
  func.func @transform_0(%arg0: i32, %arg1: i32) -> (i32, i32) {
    %c1_i32 = arith.constant 1 : i32
    %0 = arith.muli %arg0, %c1_i32 : i32
    %1 = arith.addi %0, %arg1 : i32
    %c0_i32 = arith.constant 0 : i32
    %c0_i32_0 = arith.constant 0 : i32
    return %1, %c0_i32 : i32, i32
  }
  func.func @transform_1(%arg0: i32, %arg1: i32) -> (i32, i32) {
    %c1_i32 = arith.constant 1 : i32
    %0 = arith.muli %arg0, %c1_i32 : i32
    %1 = arith.addi %0, %arg1 : i32
    %c0_i32 = arith.constant 0 : i32
    %c0_i32_0 = arith.constant 0 : i32
    return %1, %c0_i32 : i32, i32
  }
  func.func @transform_2(%arg0: i32, %arg1: i32) -> (i32, i32) {
    %c0_i32 = arith.constant 0 : i32
    %c0_i32_0 = arith.constant 0 : i32
    %c0_i32_1 = arith.constant 0 : i32
    return %c0_i32, %c0_i32_0 : i32, i32
  }
  func.func @transform_3(%arg0: i32, %arg1: i32) -> (i32, i32) {
    %c0_i32 = arith.constant 0 : i32
    %c0_i32_0 = arith.constant 0 : i32
    %c0_i32_1 = arith.constant 0 : i32
    return %c0_i32, %c0_i32_0 : i32, i32
  }
  func.func @transform_4(%arg0: i32, %arg1: i32) -> (i32, i32) {
    %c0_i32 = arith.constant 0 : i32
    %c0_i32_0 = arith.constant 0 : i32
    return %arg0, %c0_i32 : i32, i32
  }
  func.func @transform_5(%arg0: i32, %arg1: i32) -> (i32, i32) {
    %c0_i32 = arith.constant 0 : i32
    %c0_i32_0 = arith.constant 0 : i32
    return %arg0, %c0_i32 : i32, i32
  }
}

</mosaic_0001>

<llo_original>
// kernel: tpu_custom_call.1
$region0: #{tpu_custom_call.1}
  #allocation0 [shape = 'u32[]', space=smem, size = 0x4, offset = 0x4, fixed_abs, tag = 'smem constant byte address 0x4 - core index']
  #allocation1 [shape = 'u32[144,128]{1,0:T(1,128)}', space=vmem, size = 0x12000, scoped, tag = 'internal scratch']
  %s0 = inlined_call_operand.hbm [shape: f32[8,256], index: 0, kind: input, shape index: {}]
  %s1 = inlined_call_operand.hbm [shape: f32[8,256], index: 1, kind: input, shape index: {}]
  %s2 = inlined_call_operand.vmem [shape: f32[2,32], index: 2, kind: input, shape index: {}]
  %s3 = inlined_call_operand.vmem [shape: f32[2,32], index: 3, kind: input, shape index: {}]
  %s4 = inlined_call_operand.hbm [shape: f32[8,256], index: 4, kind: output, shape index: {0}]
  %s5 = inlined_call_operand.hbm [shape: f32[8,128], index: 5, kind: output, shape index: {1}]
  %6 = xla_tuple %s4, %s5
  %s7 = sld [smem:[#allocation0]]
  $region46: #{tpu_custom_call.1} parent=0
    _
  %s9 = ssub.s32 1, %s7
  %s10 = scalar_select 0, %s9, %s7
  $region1: #{tpu_custom_call.1} parent=0
    #allocation2 [shape = 'u8[8192]{0}', space=vmem, size = 0x2000, scoped, tag = 'input window, operand 0, single buffered']
    #allocation3 [shape = 's32[1]{0}', space=sflag, size = 0x4, scoped, tag = 'scoped memory for tpu_custom_call.1']
    #allocation4 [shape = 's32[1]{0}', space=sflag, size = 0x4, scoped, tag = 'scoped memory for tpu_custom_call.1']
    #allocation5 [shape = 'u8[8192]{0}', space=vmem, size = 0x2000, scoped, tag = 'input window, operand 1, single buffered']
    #allocation6 [shape = 's32[1]{0}', space=sflag, size = 0x4, scoped, tag = 'scoped memory for tpu_custom_call.1']
    #allocation7 [shape = 'u8[8192]{0}', space=vmem, size = 0x2000, scoped, tag = 'output window, operand 0, single buffered']
    #allocation8 [shape = 'u8[4096]{0}', space=vmem, size = 0x1000, scoped, tag = 'output window, operand 1, single buffered']
    #allocation9 [shape = 's32[1]{0}', space=sflag, size = 0x4, scoped, tag = 'scoped memory for tpu_custom_call.1']
    %11 = vsyncpa [#allocation3], 0
    %12 = vsyncpa [#allocation6], 0
    %13 = vsyncpa [#allocation4], 0
    %14 = vsyncpa [#allocation9], 0
    // Predicated region
    $region2: #{tpu_custom_call.1} parent=1 // pred_check
      _
    $region3: #{tpu_custom_call.1} parent=1 // pred_check_branch
      %16 = sbr.rel (0) target = $region5
    $region4: #{tpu_custom_call.1} parent=1 // pred_region
      %s17 = sadd.s32 0, 0
      %s19 = ssub.s32 256, 256
      %20 = vsyncadd [#allocation3], %s19
      %s21 = smul.addr %s17, 2
      %s22 = smul.addr %s21, 128
      %s23 = scalar_lea.hbm %s0, %s22
      %s25 = sshll.u32 [#allocation2], 4
      %s26 = int_to_ptr.vmem [resolvable:$true] %s25
      %28 = dma.hbm_to_vmem [thread:$0]  %s23, 256, %s26, [#allocation3]
    $region5: #{tpu_custom_call.1} parent=1 // pred_fallthru
      _
    // Predicated region
    $region6: #{tpu_custom_call.1} parent=1 // pred_check
      _
    $region7: #{tpu_custom_call.1} parent=1 // pred_check_branch
      %30 = sbr.rel (0) target = $region9
    $region8: #{tpu_custom_call.1} parent=1 // pred_region
      %s31 = sadd.s32 0, 0
      %s33 = ssub.s32 256, 256
      %34 = vsyncadd [#allocation6], %s33
      %s35 = smul.addr %s31, 2
      %s36 = smul.addr %s35, 128
      %s37 = scalar_lea.hbm %s1, %s36
      %s39 = sshll.u32 [#allocation5], 4
      %s40 = int_to_ptr.vmem [resolvable:$true] %s39
      %42 = dma.hbm_to_vmem [thread:$0]  %s37, 256, %s40, [#allocation6]
    $region9: #{tpu_custom_call.1} parent=1 // pred_fallthru
      _
    // Predicated region
    $region10: #{tpu_custom_call.1} parent=1 // pred_check
      _
    $region11: #{tpu_custom_call.1} parent=1 // pred_check_branch
      %44 = sbr.rel (0) target = $region13
    $region12: #{tpu_custom_call.1} parent=1 // pred_region
      _
    $region13: #{tpu_custom_call.1} parent=1 // pred_fallthru
      _
    // Predicated region
    $region14: #{tpu_custom_call.1} parent=1 // pred_check
      _
    $region15: #{tpu_custom_call.1} parent=1 // pred_check_branch
      %46 = sbr.rel (0) target = $region17
    $region16: #{tpu_custom_call.1} parent=1 // pred_region
      _
    $region17: #{tpu_custom_call.1} parent=1 // pred_fallthru
      _
    // Predicated region
    $region18: #{tpu_custom_call.1} parent=1 // pred_check
      _
    $region19: #{tpu_custom_call.1} parent=1 // pred_check_branch
      %48 = sbr.rel (0) target = $region21
    $region20: #{tpu_custom_call.1} parent=1 // pred_region
      %49 = dma.done [#allocation3], 256
    $region21: #{tpu_custom_call.1} parent=1 // pred_fallthru
      _
    // Predicated region
    $region22: #{tpu_custom_call.1} parent=1 // pred_check
      _
    $region23: #{tpu_custom_call.1} parent=1 // pred_check_branch
      %51 = sbr.rel (0) target = $region25
    $region24: #{tpu_custom_call.1} parent=1 // pred_region
      %52 = dma.done [#allocation6], 256
    $region25: #{tpu_custom_call.1} parent=1 // pred_fallthru
      _
    %s53 = sadd.s32 0, 0
    %s54 = sadd.s32 0, 0
    %p55 = scmp.eq.s32.totalorder 0, 0
    // Predicated region
    $region26: #{tpu_custom_call.1} parent=1 // pred_check
      %p56 = pneg %p55
    $region27: #{tpu_custom_call.1} parent=1 // pred_check_branch
      %58 = sbr.rel (%p56) target = $region29
    $region28: #{tpu_custom_call.1} parent=1 // pred_region
      %59 = vst [vmem:[#allocation7] sm:$0xff] 0.0
      %60 = vst [vmem:[#allocation7 + $0x8] sm:$0xff] 0.0
      %v61 = vld [vmem:[%s2] sm:$0x3]
      %v62 = vld [vmem:[%s3] sm:$0x3]
      %v63 = vadd.f32 %v62, 1.0
      %v64 = vmul.f32 %v61, %v61
      %v65 = vsub.f32 %v63, %v64
      %v66 = vmul.f32 %v62, 1.442695
      %v67 = vpow.pop %v66
      %v68 = vsub.f32 %v65, %v67
      %vm69 = vcmask 254976
      %v70 = vsel %vm69, %v68, 0.0
      %71 = vadd.xlane.f32.xlu0 %v70
      %v72 = vpop.xlane.xlu0 %71
      %v73 = vrot.slane %v72, 4
      %v74 = vadd.f32 %v72, %v73
      %v75 = vrot.slane %v74, 2
      %v76 = vadd.f32 %v74, %v75
      %v77 = vrot.slane %v76, 1
      %v78 = vadd.f32 %v76, %v77
      %s79 = vtos %v78
      %v80 = vstv %s79
      %81 = vst [vmem:[#allocation8] sm:$0xff] %v80
    $region29: #{tpu_custom_call.1} parent=1 // pred_fallthru
      _
    %s82 = smul.u32 0, 2
    %s83 = smul.addr %s82, 8
    %s84 = scalar_lea.vmem [#allocation2], %s83
    %v85 = vld [vmem:[%s84] sm:$0xff]
    %v86 = vld [vmem:[%s84 + $0x8] sm:$0xff]
    %s87 = smul.addr %s82, 8
    %s88 = scalar_lea.vmem [#allocation5], %s87
    %v89 = vld [vmem:[%s88] sm:$0xff]
    %v90 = vld [vmem:[%s88 + $0x8] sm:$0xff]
    %v91 = vsub.f32 %v85, %v89
    %v92 = vsub.f32 %v86, %v90
    %v93 = vmul.f32 %v91, %v91
    %v94 = vmul.f32 %v92, %v92
    %v95 = vld [vmem:[#allocation7] sm:$0xff]
    %v96 = vld [vmem:[#allocation7 + $0x8] sm:$0xff]
    %v97 = vadd.f32 %v95, %v93
    %v98 = vadd.f32 %v96, %v94
    %99 = vst [vmem:[#allocation7] sm:$0xff] %v97
    %100 = vst [vmem:[#allocation7 + $0x8] sm:$0xff] %v98
    // Predicated region
    $region30: #{tpu_custom_call.1} parent=1 // pred_check
      _
    $region31: #{tpu_custom_call.1} parent=1 // pred_check_branch
      %102 = sbr.rel (0) target = $region33
    $region32: #{tpu_custom_call.1} parent=1 // pred_region
      %s104 = ssub.s32 256, 256
      %105 = vsyncadd [#allocation4], %s104
      %s107 = sshll.u32 [#allocation7], 4
      %s108 = int_to_ptr.vmem [resolvable:$true] %s107
      %110 = dma.vmem_to_hbm [thread:$0]  %s108, 256, %s4, [#allocation4]
    $region33: #{tpu_custom_call.1} parent=1 // pred_fallthru
      _
    // Predicated region
    $region34: #{tpu_custom_call.1} parent=1 // pred_check
      _
    $region35: #{tpu_custom_call.1} parent=1 // pred_check_branch
      %112 = sbr.rel (0) target = $region37
    $region36: #{tpu_custom_call.1} parent=1 // pred_region
      %s114 = ssub.s32 128, 128
      %115 = vsyncadd [#allocation9], %s114
      %s117 = sshll.u32 [#allocation8], 4
      %s118 = int_to_ptr.vmem [resolvable:$true] %s117
      %120 = dma.vmem_to_hbm [thread:$0]  %s118, 128, %s5, [#allocation9]
    $region37: #{tpu_custom_call.1} parent=1 // pred_fallthru
      _
    // Predicated region
    $region38: #{tpu_custom_call.1} parent=1 // pred_check
      _
    $region39: #{tpu_custom_call.1} parent=1 // pred_check_branch
      %122 = sbr.rel (0) target = $region41
    $region40: #{tpu_custom_call.1} parent=1 // pred_region
      %123 = dma.done [#allocation4], 256
    $region41: #{tpu_custom_call.1} parent=1 // pred_fallthru
      _
    // Predicated region
    $region42: #{tpu_custom_call.1} parent=1 // pred_check
      _
    $region43: #{tpu_custom_call.1} parent=1 // pred_check_branch
      %125 = sbr.rel (0) target = $region45
    $region44: #{tpu_custom_call.1} parent=1 // pred_region
      %126 = dma.done [#allocation9], 128
    $region45: #{tpu_custom_call.1} parent=1 // pred_fallthru
      _
    %127 = vsyncpa [#allocation3], 1
    %128 = vsyncpa [#allocation6], 1
    %129 = vsyncpa [#allocation4], 1
    %130 = vsyncpa [#allocation9], 1

</llo_original>
